<compile_context>
chip_gen: v7x
topology: tpu7x:2x2x1
jax: 0.10.0
libtpu: 0.0.40
codegen_flags: <defaults>
</compile_context>

<pallas_src>
import functools

import jax
import jax.numpy as jnp
from jax.experimental import pallas as pl
from jax.experimental.pallas import tpu as pltpu


def _round_up(n, m):
    return (n + m - 1) // m * m


def _pick_batch_tile(batch, feat, itemsize=4, vmem_budget_bytes=16 << 20):
    """Largest multiple-of-8 batch tile whose x in+out (double-buffered) blocks
    fit the budget, capped at the sublane-padded batch size.  The 16 MiB
    default keeps two such tiles (one per TensorCore) well inside v7x's 64 MiB
    VMEM; raise the budget on v5e/v6e (128 MiB) for very large batches."""
    per_row = 4 * feat * itemsize                   # (in + out) * double buffer
    tb = max(8, (vmem_budget_bytes // per_row) // 8 * 8)
    return int(min(tb, _round_up(batch, 8)))


# --------------------- fast path: pre-composed affine ------------------------

def _affine_kernel(x_ref, a_ref, c_ref, o_ref):
    """One batch tile: y = x * A + C with per-feature A, C of shape (1, D)."""
    o_ref[...] = x_ref[...] * a_ref[...] + c_ref[...]


def _precompose(s_all, b_all, reverse):
    """Compose the whole affine chain into a single y = x * A + C map (f32)."""
    S = jnp.sum(s_all, axis=0)                      # (D,)  total log-scale
    cs = jnp.cumsum(s_all, axis=0)                  # (L,D) cumsum_{i<=j} s_i
    if reverse:
        a_vec = jnp.exp(-S)
        c_vec = -jnp.sum(b_all * jnp.exp(-cs), axis=0)
    else:
        a_vec = jnp.exp(S)
        c_vec = jnp.sum(b_all * jnp.exp(S[None, :] - cs), axis=0)
    return a_vec[None, :], c_vec[None, :]           # (1, D) each


# --------------------- generic path: per-layer chain -------------------------

def _chain_kernel(x_ref, s_ref, b_ref, o_ref, *, reverse):
    """Grid = (batch_tiles, L); one step applies one layer to the resident tile."""
    layer = pl.program_id(1)

    @pl.when(layer == 0)
    def _():
        o_ref[...] = x_ref[...]

    s = s_ref[...]                                   # (1, D) log-scale
    b = b_ref[...]                                   # (1, D) shift
    if reverse:
        o_ref[...] = (o_ref[...] - b) * jnp.exp(-s)
    else:
        o_ref[...] = o_ref[...] * jnp.exp(s) + b


# ------------------------------ wrapper ---------------------------------------

def sequential_flow(x_nchw, logpx, s_all, b_all, *, reverse=False,
                    precompose=True, batch_tile=None,
                    vmem_limit_bytes=48 * 1024 * 1024):
    """Apply the chain of L affine flow layers.

    x_nchw : (B, C, H, W) float32
    logpx  : (B, 1) float32 or None
    s_all  : (L, D) per-layer log-scales, D = C*H*W (flat NCHW feature order)
    b_all  : (L, D) per-layer shifts
    """
    B, C, H, W = x_nchw.shape
    D = C * H * W
    L = s_all.shape[0]

    x = x_nchw.reshape(B, D).astype(jnp.float32)
    s_all = s_all.astype(jnp.float32)
    b_all = b_all.astype(jnp.float32)

    # Log-det bookkeeping entirely in XLA (one scalar for the whole chain).
    if logpx is not None:
        total_logdet = jnp.sum(s_all)
        logp_out = (logpx.astype(jnp.float32) + total_logdet if reverse
                    else logpx.astype(jnp.float32) - total_logdet)

    # Batch tiling: TB multiple of 8 (full f32 sublane occupancy); pad B up.
    TB = batch_tile if batch_tile is not None else _pick_batch_tile(B, D)
    assert TB % 8 == 0
    Bp = _round_up(B, TB)
    if Bp != B:
        x = jnp.pad(x, ((0, Bp - B), (0, 0)))
    n_tiles = Bp // TB

    if precompose:
        a_vec, c_vec = _precompose(s_all, b_all, reverse)
        y = pl.pallas_call(
            _affine_kernel,
            out_shape=jax.ShapeDtypeStruct((Bp, D), jnp.float32),
            grid_spec=pltpu.PrefetchScalarGridSpec(
                num_scalar_prefetch=0,
                grid=(n_tiles,),
                in_specs=[
                    pl.BlockSpec((TB, D), lambda i: (i, 0)),   # x batch tile
                    pl.BlockSpec((1, D), lambda i: (0, 0)),    # A (per-feature)
                    pl.BlockSpec((1, D), lambda i: (0, 0)),    # C (per-feature)
                ],
                out_specs=pl.BlockSpec((TB, D), lambda i: (i, 0)),
            ),
            input_output_aliases={0: 0},            # donate x's HBM buffer
            compiler_params=pltpu.CompilerParams(
                dimension_semantics=("parallel",),  # megacore over batch tiles
                vmem_limit_bytes=vmem_limit_bytes),
        )(x, a_vec, c_vec)
    else:
        # Reverse handled purely by the index_map -> no s_all[::-1] round-trip.
        if reverse:
            sb_map = lambda i, l: (L - 1 - l, 0)
        else:
            sb_map = lambda i, l: (l, 0)
        # NOTE: if L is large and the tiny (1,D) s/b DMAs ever expose latency,
        # add pipeline_mode=pl.Buffered(3) to their BlockSpecs.
        y = pl.pallas_call(
            functools.partial(_chain_kernel, reverse=reverse),
            out_shape=jax.ShapeDtypeStruct((Bp, D), jnp.float32),
            grid_spec=pltpu.PrefetchScalarGridSpec(
                num_scalar_prefetch=0,
                grid=(n_tiles, L),                  # batch outer, layers inner
                in_specs=[
                    pl.BlockSpec((TB, D), lambda i, l: (i, 0)),  # x batch tile
                    pl.BlockSpec((1, D), sb_map),                # per-layer s
                    pl.BlockSpec((1, D), sb_map),                # per-layer b
                ],
                out_specs=pl.BlockSpec((TB, D), lambda i, l: (i, 0)),
            ),
            input_output_aliases={0: 0},            # donate x's HBM buffer
            compiler_params=pltpu.CompilerParams(
                dimension_semantics=("parallel", "arbitrary"),
                vmem_limit_bytes=vmem_limit_bytes),
        )(x, s_all, b_all)

    y = y[:B].reshape(B, C, H, W)
    if logpx is None:
        return y
    return y, logp_out


# ------------------------------ reference -------------------------------------

def _reference(x_nchw, logpx, s_all, b_all, *, reverse=False):
    """Pure-JAX reference mirroring SequentialFlow.forward layer-by-layer."""
    B = x_nchw.shape[0]
    x = x_nchw.reshape(B, -1)
    L = s_all.shape[0]
    inds = range(L - 1, -1, -1) if reverse else range(L)
    for i in inds:
        s, b = s_all[i], b_all[i]
        if reverse:
            x = (x - b) * jnp.exp(-s)
            logpx = logpx + jnp.sum(s)
        else:
            x = x * jnp.exp(s) + b
            logpx = logpx - jnp.sum(s)
    return x.reshape(x_nchw.shape), logpx


if __name__ == "__main__":
    key = jax.random.PRNGKey(0)
    k_x, k_s, k_b = jax.random.split(key, 3)

    B, C, H, W = 2, 4, 16, 16
    D = C * H * W
    L = 6  # number of flow layers in the chain

    x = jax.random.normal(k_x, (B, C, H, W), dtype=jnp.float32)
    logpx = jnp.zeros((B, 1), dtype=jnp.float32)

    # Deterministic per-layer parameters (ActNorm-style affine flow layers).
    s_all = 0.1 * jax.random.normal(k_s, (L, D), dtype=jnp.float32)
    b_all = 0.1 * jax.random.normal(k_b, (L, D), dtype=jnp.float32)

    y_ref, logpy_ref = _reference(x, logpx, s_all, b_all, reverse=False)

    # --- fast path: pre-composed single affine pass ---------------------------
    y, logpy = sequential_flow(x, logpx, s_all, b_all, reverse=False)
    jax.block_until_ready((y, logpy))
    assert jnp.allclose(y, y_ref, atol=1e-5, rtol=1e-5)
    assert jnp.allclose(logpy, logpy_ref, atol=1e-4, rtol=1e-5)

    x_rec, logpx_rec = sequential_flow(y, logpy, s_all, b_all, reverse=True)
    jax.block_until_ready((x_rec, logpx_rec))
    assert jnp.allclose(x_rec, x, atol=1e-4, rtol=1e-4)
    assert jnp.allclose(logpx_rec, logpx, atol=1e-4, rtol=1e-4)

    # --- generic path: per-layer chain kernel (x resident across layers) ------
    y2, logpy2 = sequential_flow(x, logpx, s_all, b_all, reverse=False,
                                 precompose=False)
    jax.block_until_ready((y2, logpy2))
    assert jnp.allclose(y2, y_ref, atol=1e-5, rtol=1e-5)
    assert jnp.allclose(logpy2, logpy_ref, atol=1e-4, rtol=1e-5)

    x_rec2, logpx_rec2 = sequential_flow(y2, logpy2, s_all, b_all, reverse=True,
                                         precompose=False)
    jax.block_until_ready((x_rec2, logpx_rec2))
    assert jnp.allclose(x_rec2, x, atol=1e-4, rtol=1e-4)
    assert jnp.allclose(logpx_rec2, logpx, atol=1e-4, rtol=1e-4)

    print("KERNEL_OK")
</pallas_src>

<mosaic_0001>
module attributes {stable_mosaic.version = 11 : i64} {
  func.func @_affine_kernel(%arg0: i32, %arg1: memref<8x1024xf32, #tpu.memory_space<vmem>>, %arg2: memref<1x1024xf32, #tpu.memory_space<vmem>>, %arg3: memref<1x1024xf32, #tpu.memory_space<vmem>>, %arg4: memref<8x1024xf32, #tpu.memory_space<vmem>>) attributes {dimension_semantics = [#tpu.dimension_semantics<parallel>], iteration_bounds = array<i64: 1>, scalar_prefetch = 0 : i64, scratch_operands = 0 : i64, tpu.core_type = #tpu.core_type<tc>, window_params = [{transform_indices = @transform_0, window_bounds = array<i64: 8, 1024>}, {pipeline_mode = #tpu.pipeline_mode<synchronous>, transform_indices = @transform_1, window_bounds = array<i64: 1, 1024>}, {pipeline_mode = #tpu.pipeline_mode<synchronous>, transform_indices = @transform_2, window_bounds = array<i64: 1, 1024>}, {transform_indices = @transform_3, window_bounds = array<i64: 8, 1024>}]} {
    %c0 = arith.constant 0 : index
    %c0_0 = arith.constant 0 : index
    %0 = vector.load %arg1[%c0, %c0_0] : memref<8x1024xf32, #tpu.memory_space<vmem>>, vector<8x1024xf32>
    %c0_1 = arith.constant 0 : index
    %c0_2 = arith.constant 0 : index
    %1 = vector.load %arg2[%c0_1, %c0_2] : memref<1x1024xf32, #tpu.memory_space<vmem>>, vector<1x1024xf32>
    %2 = vector.broadcast %1 : vector<1x1024xf32> to vector<8x1024xf32>
    %3 = arith.mulf %0, %2 : vector<8x1024xf32>
    %c0_3 = arith.constant 0 : index
    %c0_4 = arith.constant 0 : index
    %4 = vector.load %arg3[%c0_3, %c0_4] : memref<1x1024xf32, #tpu.memory_space<vmem>>, vector<1x1024xf32>
    %5 = vector.broadcast %4 : vector<1x1024xf32> to vector<8x1024xf32>
    %6 = arith.addf %3, %5 : vector<8x1024xf32>
    %c0_5 = arith.constant 0 : index
    %c0_6 = arith.constant 0 : index
    %7 = vector.load %arg4[%c0_5, %c0_6] : memref<8x1024xf32, #tpu.memory_space<vmem>>, vector<8x1024xf32>
    tpu.vector_store %arg4[%c0_5, %c0_6], %6 {strides = array<i32>} : memref<8x1024xf32, #tpu.memory_space<vmem>>, vector<8x1024xf32>,
    return
  }
  func.func @transform_0(%arg0: i32) -> (i32, i32) {
    %c0_i32 = arith.constant 0 : i32
    %c0_i32_0 = arith.constant 0 : i32
    return %arg0, %c0_i32 : i32, i32
  }
  func.func @transform_1(%arg0: i32) -> (i32, i32) {
    %c0_i32 = arith.constant 0 : i32
    %c0_i32_0 = arith.constant 0 : i32
    %c0_i32_1 = arith.constant 0 : i32
    return %c0_i32, %c0_i32_0 : i32, i32
  }
  func.func @transform_2(%arg0: i32) -> (i32, i32) {
    %c0_i32 = arith.constant 0 : i32
    %c0_i32_0 = arith.constant 0 : i32
    %c0_i32_1 = arith.constant 0 : i32
    return %c0_i32, %c0_i32_0 : i32, i32
  }
  func.func @transform_3(%arg0: i32) -> (i32, i32) {
    %c0_i32 = arith.constant 0 : i32
    %c0_i32_0 = arith.constant 0 : i32
    return %arg0, %c0_i32 : i32, i32
  }
}

</mosaic_0001>

<llo_original>
// kernel: tpu_custom_call.1
$region0: #{tpu_custom_call.1}
  #allocation0 [shape = 'u32[]', space=smem, size = 0x4, offset = 0x4, fixed_abs, tag = 'smem constant byte address 0x4 - core index']
  #allocation1 [shape = 'u32[144,128]{1,0:T(1,128)}', space=vmem, size = 0x12000, scoped, tag = 'internal scratch']
  %s0 = inlined_call_operand.hbm [shape: f32[8,1024], index: 0, kind: input, shape index: {}, may-alias: {0,3}]
  %s1 = inlined_call_operand.vmem [shape: f32[1,1024], index: 1, kind: input, shape index: {}]
  %s2 = inlined_call_operand.vmem [shape: f32[1,1024], index: 2, kind: input, shape index: {}]
  %s3 = inlined_call_operand.hbm [shape: f32[8,1024], index: 3, kind: output, shape index: {}, may-alias: {0,3}]
  %s4 = sld [smem:[#allocation0]]
  $region26: #{tpu_custom_call.1} parent=0
    _
  %s6 = ssub.s32 1, %s4
  %s7 = scalar_select 0, %s6, %s4
  $region1: #{tpu_custom_call.1} parent=0
    #allocation2 [shape = 'u8[32768]{0}', space=vmem, size = 0x8000, scoped, tag = 'input window, operand 0, single buffered']
    #allocation3 [shape = 's32[1]{0}', space=sflag, size = 0x4, scoped, tag = 'scoped memory for tpu_custom_call.1']
    #allocation4 [shape = 's32[1]{0}', space=sflag, size = 0x4, scoped, tag = 'scoped memory for tpu_custom_call.1']
    #allocation5 [shape = 'u8[32768]{0}', space=vmem, size = 0x8000, scoped, tag = 'output window, operand 0, single buffered']
    %8 = vsyncpa [#allocation3], 0
    %9 = vsyncpa [#allocation4], 0
    // Predicated region
    $region2: #{tpu_custom_call.1} parent=1 // pred_check
      _
    $region3: #{tpu_custom_call.1} parent=1 // pred_check_branch
      %11 = sbr.rel (0) target = $region5
    $region4: #{tpu_custom_call.1} parent=1 // pred_region
      %s13 = ssub.s32 1024, 1024
      %14 = vsyncadd [#allocation3], %s13
      %s16 = sshll.u32 [#allocation2], 4
      %s17 = int_to_ptr.vmem [resolvable:$true] %s16
      %19 = dma.hbm_to_vmem [thread:$0]  %s0, 1024, %s17, [#allocation3]
    $region5: #{tpu_custom_call.1} parent=1 // pred_fallthru
      _
    // Predicated region
    $region6: #{tpu_custom_call.1} parent=1 // pred_check
      _
    $region7: #{tpu_custom_call.1} parent=1 // pred_check_branch
      %21 = sbr.rel (0) target = $region9
    $region8: #{tpu_custom_call.1} parent=1 // pred_region
      _
    $region9: #{tpu_custom_call.1} parent=1 // pred_fallthru
      _
    // Predicated region
    $region10: #{tpu_custom_call.1} parent=1 // pred_check
      _
    $region11: #{tpu_custom_call.1} parent=1 // pred_check_branch
      %23 = sbr.rel (0) target = $region13
    $region12: #{tpu_custom_call.1} parent=1 // pred_region
      _
    $region13: #{tpu_custom_call.1} parent=1 // pred_fallthru
      _
    // Predicated region
    $region14: #{tpu_custom_call.1} parent=1 // pred_check
      _
    $region15: #{tpu_custom_call.1} parent=1 // pred_check_branch
      %25 = sbr.rel (0) target = $region17
    $region16: #{tpu_custom_call.1} parent=1 // pred_region
      %26 = dma.done [#allocation3], 1024
    $region17: #{tpu_custom_call.1} parent=1 // pred_fallthru
      _
    %v27 = vld [vmem:[#allocation2] sm:$0xff]
    %v28 = vld [vmem:[#allocation2 + $0x8] sm:$0xff]
    %v29 = vld [vmem:[#allocation2 + $0x10] sm:$0xff]
    %v30 = vld [vmem:[#allocation2 + $0x18] sm:$0xff]
    %v31 = vld [vmem:[#allocation2 + $0x20] sm:$0xff]
    %v32 = vld [vmem:[#allocation2 + $0x28] sm:$0xff]
    %v33 = vld [vmem:[#allocation2 + $0x30] sm:$0xff]
    %v34 = vld [vmem:[#allocation2 + $0x38] sm:$0xff]
    %v35 = vld [vmem:[%s1] sm:$0xff]
    %v37 = vlaneseq
    %v38 = vshrl.u32 %v37, 7
    %v39 = vsub.s32 0, %v38
    %v40 = vrot.slane %v35, %v39
    %v41 = vlaneseq
    %v42 = vshrl.u32 %v41, 7
    %v43 = vsub.s32 1, %v42
    %v44 = vrot.slane %v35, %v43
    %v45 = vlaneseq
    %v46 = vshrl.u32 %v45, 7
    %v47 = vsub.s32 2, %v46
    %v48 = vrot.slane %v35, %v47
    %v49 = vlaneseq
    %v50 = vshrl.u32 %v49, 7
    %v51 = vsub.s32 3, %v50
    %v52 = vrot.slane %v35, %v51
    %v53 = vlaneseq
    %v54 = vshrl.u32 %v53, 7
    %v55 = vsub.s32 4, %v54
    %v56 = vrot.slane %v35, %v55
    %v57 = vlaneseq
    %v58 = vshrl.u32 %v57, 7
    %v59 = vsub.s32 5, %v58
    %v60 = vrot.slane %v35, %v59
    %v61 = vlaneseq
    %v62 = vshrl.u32 %v61, 7
    %v63 = vsub.s32 6, %v62
    %v64 = vrot.slane %v35, %v63
    %v65 = vlaneseq
    %v66 = vshrl.u32 %v65, 7
    %v67 = vsub.s32 7, %v66
    %v68 = vrot.slane %v35, %v67
    %v77 = vmul.f32 %v27, %v40
    %v78 = vmul.f32 %v28, %v44
    %v79 = vmul.f32 %v29, %v48
    %v80 = vmul.f32 %v30, %v52
    %v81 = vmul.f32 %v31, %v56
    %v82 = vmul.f32 %v32, %v60
    %v83 = vmul.f32 %v33, %v64
    %v84 = vmul.f32 %v34, %v68
    %v85 = vld [vmem:[%s2] sm:$0xff]
    %v87 = vlaneseq
    %v88 = vshrl.u32 %v87, 7
    %v89 = vsub.s32 0, %v88
    %v90 = vrot.slane %v85, %v89
    %v91 = vlaneseq
    %v92 = vshrl.u32 %v91, 7
    %v93 = vsub.s32 1, %v92
    %v94 = vrot.slane %v85, %v93
    %v95 = vlaneseq
    %v96 = vshrl.u32 %v95, 7
    %v97 = vsub.s32 2, %v96
    %v98 = vrot.slane %v85, %v97
    %v99 = vlaneseq
    %v100 = vshrl.u32 %v99, 7
    %v101 = vsub.s32 3, %v100
    %v102 = vrot.slane %v85, %v101
    %v103 = vlaneseq
    %v104 = vshrl.u32 %v103, 7
    %v105 = vsub.s32 4, %v104
    %v106 = vrot.slane %v85, %v105
    %v107 = vlaneseq
    %v108 = vshrl.u32 %v107, 7
    %v109 = vsub.s32 5, %v108
    %v110 = vrot.slane %v85, %v109
    %v111 = vlaneseq
    %v112 = vshrl.u32 %v111, 7
    %v113 = vsub.s32 6, %v112
    %v114 = vrot.slane %v85, %v113
    %v115 = vlaneseq
    %v116 = vshrl.u32 %v115, 7
    %v117 = vsub.s32 7, %v116
    %v118 = vrot.slane %v85, %v117
    %v127 = vadd.f32 %v77, %v90
    %v128 = vadd.f32 %v78, %v94
    %v129 = vadd.f32 %v79, %v98
    %v130 = vadd.f32 %v80, %v102
    %v131 = vadd.f32 %v81, %v106
    %v132 = vadd.f32 %v82, %v110
    %v133 = vadd.f32 %v83, %v114
    %v134 = vadd.f32 %v84, %v118
    %135 = vst [vmem:[#allocation5] sm:$0xff] %v127
    %136 = vst [vmem:[#allocation5 + $0x8] sm:$0xff] %v128
    %137 = vst [vmem:[#allocation5 + $0x10] sm:$0xff] %v129
    %138 = vst [vmem:[#allocation5 + $0x18] sm:$0xff] %v130
    %139 = vst [vmem:[#allocation5 + $0x20] sm:$0xff] %v131
    %140 = vst [vmem:[#allocation5 + $0x28] sm:$0xff] %v132
    %141 = vst [vmem:[#allocation5 + $0x30] sm:$0xff] %v133
    %142 = vst [vmem:[#allocation5 + $0x38] sm:$0xff] %v134
    // Predicated region
    $region18: #{tpu_custom_call.1} parent=1 // pred_check
      _
    $region19: #{tpu_custom_call.1} parent=1 // pred_check_branch
      %144 = sbr.rel (0) target = $region21
    $region20: #{tpu_custom_call.1} parent=1 // pred_region
      %s146 = ssub.s32 1024, 1024
      %147 = vsyncadd [#allocation4], %s146
      %s149 = sshll.u32 [#allocation5], 4
      %s150 = int_to_ptr.vmem [resolvable:$true] %s149
      %152 = dma.vmem_to_hbm [thread:$0]  %s150, 1024, %s3, [#allocation4]
    $region21: #{tpu_custom_call.1} parent=1 // pred_fallthru
      _
    // Predicated region
    $region22: #{tpu_custom_call.1} parent=1 // pred_check
      _
    $region23: #{tpu_custom_call.1} parent=1 // pred_check_branch
      %154 = sbr.rel (0) target = $region25
    $region24: #{tpu_custom_call.1} parent=1 // pred_region
      %155 = dma.done [#allocation4], 1024
    $region25: #{tpu_custom_call.1} parent=1 // pred_fallthru
      _
    %156 = vsyncpa [#allocation3], 1
    %157 = vsyncpa [#allocation4], 1

</llo_original>
